<compile_context>
chip_gen: v7x
topology: tpu7x:2x2x1
jax: 0.10.0
libtpu: 0.0.40
codegen_flags: <defaults>
</compile_context>

<pallas_src>
import jax
import jax.numpy as jnp
from jax.experimental import pallas as pl
from jax.experimental.pallas import tpu as pltpu


# Rows per grid step.  Multiple of 128 (lane width).  Two double-buffered
# (F, TILE_N) f32 x-tiles plus the (1, TILE_N) output tile are a few KiB for
# F=2, far under the scoped-VMEM limits on v5e/v6e/v7x, while big enough to
# amortize the ~0.35 us per-grid-step overhead for realistic N.
TILE_N = 512


def _logreg_kernel(xt_ref, w_ref, b_ref, o_ref):
    # xt_ref: (F, TILE_N) f32 VMEM tile -- samples on the lane axis.
    # w_ref : (F,) f32 in SMEM, b_ref: (1,) f32 in SMEM (scalar reads).
    # o_ref : (1, TILE_N) f32 lane-dense output tile.
    #
    # F is tiny, so do the weighted sum on the VPU instead of the MXU.
    f_dim = xt_ref.shape[0]
    acc = xt_ref[0:1, :] * w_ref[0]
    for f in range(1, f_dim):            # static unroll over features
        acc = acc + xt_ref[f:f + 1, :] * w_ref[f]
    o_ref[...] = jax.nn.sigmoid(acc + b_ref[0])


def logistic_regression_forward(x, W, b, *, tile_n=TILE_N):
    """x: (N, F) f32, W: (F, 1) f32, b: (1,) f32 -> (N, 1) f32."""
    N, F = x.shape
    n_pad = pl.cdiv(N, tile_n) * tile_n

    # Pad the ragged last tile, then present samples on the lane axis
    # (layout plumbing only; padded rows are sliced off below).
    xt = jnp.pad(x.astype(jnp.float32), ((0, n_pad - N), (0, 0))).T   # (F, n_pad)
    w_vec = W.reshape(F).astype(jnp.float32)                          # scalars -> SMEM
    b_vec = b.reshape(1).astype(jnp.float32)

    out = pl.pallas_call(
        _logreg_kernel,
        out_shape=jax.ShapeDtypeStruct((1, n_pad), jnp.float32),
        grid=(n_pad // tile_n,),
        in_specs=[
            pl.BlockSpec((F, tile_n), lambda i: (0, i)),   # x tile (VMEM, pipelined)
            pl.BlockSpec(memory_space=pltpu.SMEM),         # W (scalar weights)
            pl.BlockSpec(memory_space=pltpu.SMEM),         # b (scalar bias)
        ],
        out_specs=pl.BlockSpec((1, tile_n), lambda i: (0, i)),
        compiler_params=pltpu.CompilerParams(
            dimension_semantics=("parallel",)),            # shard tiles across 2 TCs on v7x
        cost_estimate=pl.CostEstimate(
            flops=2 * n_pad * F,
            transcendentals=n_pad,
            bytes_accessed=4 * (n_pad * F + F + 1 + n_pad)),
    )(xt, w_vec, b_vec)

    return out[0, :N].reshape(N, 1)


if __name__ == "__main__":
    key = jax.random.PRNGKey(0)
    k_w, k_x = jax.random.split(key)

    # Parameters matching the module __init__: W ~ U(-0.1, 0.1) of shape (2, 1), b = 0.
    W = jax.random.uniform(k_w, (2, 1), jnp.float32, minval=-0.1, maxval=0.1)
    b = jnp.zeros((1,), jnp.float32)

    # Example input: batch of 8 samples with 2 features each.
    x = jax.random.normal(k_x, (8, 2), jnp.float32)

    pred = logistic_regression_forward(x, W, b)
    pred = jax.block_until_ready(pred)

    # Reference check in plain JAX (same math).
    ref = jax.nn.sigmoid(x @ W + b)
    assert pred.shape == (8, 1)
    assert jnp.allclose(pred, ref, atol=1e-6), "mismatch vs reference"

    print("KERNEL_OK")
</pallas_src>

<mosaic_0001>
module attributes {stable_mosaic.version = 11 : i64} {
  func.func @_logreg_kernel(%arg0: i32, %arg1: memref<2x512xf32, #tpu.memory_space<vmem>>, %arg2: memref<2xf32, #tpu.memory_space<smem>>, %arg3: memref<1xf32, #tpu.memory_space<smem>>, %arg4: memref<1x512xf32, #tpu.memory_space<vmem>>) attributes {dimension_semantics = [#tpu.dimension_semantics<parallel>], iteration_bounds = array<i64: 1>, scalar_prefetch = 0 : i64, scratch_operands = 0 : i64, tpu.core_type = #tpu.core_type<tc>, window_params = [{transform_indices = @transform_0, window_bounds = array<i64: 2, 512>}, {transform_indices = @transform_1, window_bounds = array<i64: 2>}, {transform_indices = @transform_2, window_bounds = array<i64: 1>}, {transform_indices = @transform_3, window_bounds = array<i64: 1, 512>}]} {
    %c0 = arith.constant 0 : index
    %c0_0 = arith.constant 0 : index
    %0 = vector.load %arg1[%c0, %c0_0] : memref<2x512xf32, #tpu.memory_space<vmem>>, vector<1x512xf32>
    %c0_1 = arith.constant 0 : index
    %1 = memref.load %arg2[%c0_1] : memref<2xf32, #tpu.memory_space<smem>>
    %2 = vector.broadcast %1 : f32 to vector<1x512xf32>
    %3 = arith.mulf %0, %2 : vector<1x512xf32>
    %c1 = arith.constant 1 : index
    %c0_2 = arith.constant 0 : index
    %4 = vector.load %arg1[%c1, %c0_2] : memref<2x512xf32, #tpu.memory_space<vmem>>, vector<1x512xf32>
    %c1_3 = arith.constant 1 : index
    %5 = memref.load %arg2[%c1_3] : memref<2xf32, #tpu.memory_space<smem>>
    %6 = vector.broadcast %5 : f32 to vector<1x512xf32>
    %7 = arith.mulf %4, %6 : vector<1x512xf32>
    %8 = arith.addf %3, %7 : vector<1x512xf32>
    %c0_4 = arith.constant 0 : index
    %9 = memref.load %arg3[%c0_4] : memref<1xf32, #tpu.memory_space<smem>>
    %10 = vector.broadcast %9 : f32 to vector<1x512xf32>
    %11 = arith.addf %8, %10 : vector<1x512xf32>
    %12 = arith.negf %11 : vector<1x512xf32>
    %13 = math.exp %12 : vector<1x512xf32>
    %cst = arith.constant 1.000000e+00 : f32
    %14 = vector.broadcast %cst : f32 to vector<1x512xf32>
    %15 = arith.addf %14, %13 : vector<1x512xf32>
    %16 = arith.divf %14, %15 : vector<1x512xf32>
    %c0_5 = arith.constant 0 : index
    %c0_6 = arith.constant 0 : index
    %17 = vector.load %arg4[%c0_5, %c0_6] : memref<1x512xf32, #tpu.memory_space<vmem>>, vector<1x512xf32>
    tpu.vector_store %arg4[%c0_5, %c0_6], %16 {strides = array<i32>} : memref<1x512xf32, #tpu.memory_space<vmem>>, vector<1x512xf32>,
    return
  }
  func.func @transform_0(%arg0: i32) -> (i32, i32) {
    %c0_i32 = arith.constant 0 : i32
    %c0_i32_0 = arith.constant 0 : i32
    return %c0_i32, %arg0 : i32, i32
  }
  func.func @transform_1(%arg0: i32) -> i32 {
    %c0_i32 = arith.constant 0 : i32
    %c0_i32_0 = arith.constant 0 : i32
    return %c0_i32 : i32
  }
  func.func @transform_2(%arg0: i32) -> i32 {
    %c0_i32 = arith.constant 0 : i32
    %c0_i32_0 = arith.constant 0 : i32
    return %c0_i32 : i32
  }
  func.func @transform_3(%arg0: i32) -> (i32, i32) {
    %c0_i32 = arith.constant 0 : i32
    %c0_i32_0 = arith.constant 0 : i32
    return %c0_i32, %arg0 : i32, i32
  }
}

</mosaic_0001>

<llo_original>
// kernel: tpu_custom_call.1
$region0: #{tpu_custom_call.1}
  #allocation0 [shape = 'u32[]', space=smem, size = 0x4, offset = 0x4, fixed_abs, tag = 'smem constant byte address 0x4 - core index']
  #allocation1 [shape = 'u32[144,128]{1,0:T(1,128)}', space=vmem, size = 0x12000, scoped, tag = 'internal scratch']
  #allocation2 [shape = 'f32[1]{0:T(128)S(6)}', space=smem, size = 0x200, scoped, tag = 'scoped memory for tpu_custom_call.1']
  %s0 = inlined_call_operand.hbm [shape: f32[2,512], index: 0, kind: input, shape index: {}]
  %s1 = inlined_call_operand.vmem [shape: f32[2], index: 1, kind: input, shape index: {}]
  %s2 = inlined_call_operand.<no memory space> [shape: f32[1], index: 2, kind: input, shape index: {}]
  %s3 = inlined_call_operand.hbm [shape: f32[1,512], index: 3, kind: output, shape index: {}]
  %s4 = sld [smem:[#allocation0]]
  $region30: #{tpu_custom_call.1} parent=0
    _
  %s6 = ssub.s32 1, %s4
  %s7 = scalar_select 0, %s6, %s4
  %8 = sst [smem:[#allocation2]] %s2
  $region1: #{tpu_custom_call.1} parent=0
    #allocation3 [shape = 'u8[4096]{0}', space=vmem, size = 0x1000, scoped, tag = 'input window, operand 0, single buffered']
    #allocation4 [shape = 's32[1]{0}', space=sflag, size = 0x4, scoped, tag = 'scoped memory for tpu_custom_call.1']
    #allocation5 [shape = 's32[1]{0}', space=sflag, size = 0x4, scoped, tag = 'scoped memory for tpu_custom_call.1']
    #allocation6 [shape = 's32[1]{0}', space=sflag, size = 0x4, scoped, tag = 'scoped memory for tpu_custom_call.1']
    #allocation7 [shape = 'u8[512]{0}', space=smem, size = 0x200, scoped, tag = 'input window, operand 1, single buffered']
    #allocation8 [shape = 'u8[2048]{0}', space=vmem, size = 0x800, scoped, tag = 'output window, operand 0, single buffered']
    %9 = vsyncpa [#allocation4], 0
    %10 = vsyncpa [#allocation6], 0
    %11 = vsyncpa [#allocation5], 0
    // Predicated region
    $region2: #{tpu_custom_call.1} parent=1 // pred_check
      _
    $region3: #{tpu_custom_call.1} parent=1 // pred_check_branch
      %13 = sbr.rel (0) target = $region5
    $region4: #{tpu_custom_call.1} parent=1 // pred_region
      %s15 = ssub.s32 128, 128
      %16 = vsyncadd [#allocation4], %s15
      %s18 = sshll.u32 [#allocation3], 4
      %s19 = int_to_ptr.vmem [resolvable:$true] %s18
      %21 = dma.hbm_to_vmem [thread:$0]  %s0, 128, %s19, [#allocation4]
    $region5: #{tpu_custom_call.1} parent=1 // pred_fallthru
      _
    // Predicated region
    $region6: #{tpu_custom_call.1} parent=1 // pred_check
      _
    $region7: #{tpu_custom_call.1} parent=1 // pred_check_branch
      %23 = sbr.rel (0) target = $region9
    $region8: #{tpu_custom_call.1} parent=1 // pred_region
      %s25 = ssub.s32 16, 16
      %26 = vsyncadd [#allocation6], %s25
      %s28 = sshll.u32 %s1, 4
      %s29 = int_to_ptr.vmem [resolvable:$true] %s28
      %31 = dma.vmem_to_smem %s29, 16, [#allocation7], [#allocation6]
    $region9: #{tpu_custom_call.1} parent=1 // pred_fallthru
      _
    // Predicated region
    $region10: #{tpu_custom_call.1} parent=1 // pred_check
      _
    $region11: #{tpu_custom_call.1} parent=1 // pred_check_branch
      %33 = sbr.rel (0) target = $region13
    $region12: #{tpu_custom_call.1} parent=1 // pred_region
      _
    $region13: #{tpu_custom_call.1} parent=1 // pred_fallthru
      _
    // Predicated region
    $region14: #{tpu_custom_call.1} parent=1 // pred_check
      _
    $region15: #{tpu_custom_call.1} parent=1 // pred_check_branch
      %35 = sbr.rel (0) target = $region17
    $region16: #{tpu_custom_call.1} parent=1 // pred_region
      %36 = dma.done [#allocation4], 128
    $region17: #{tpu_custom_call.1} parent=1 // pred_fallthru
      _
    // Predicated region
    $region18: #{tpu_custom_call.1} parent=1 // pred_check
      _
    $region19: #{tpu_custom_call.1} parent=1 // pred_check_branch
      %38 = sbr.rel (0) target = $region21
    $region20: #{tpu_custom_call.1} parent=1 // pred_region
      %39 = dma.done [#allocation6], 16
    $region21: #{tpu_custom_call.1} parent=1 // pred_fallthru
      _
    %40 = sfence
    %v41 = vld [vmem:[#allocation3] ss:$2 sm:$0xf]
    %s42 = sld [smem:[#allocation7]]
    %v43 = vstv %s42
    %v44 = vmul.f32 %v41, %v43
    %s45 = scalar_lea.vmem [#allocation3], 1
    %v46 = vld [vmem:[%s45] ss:$2 sm:$0xf]
    %s47 = sld [smem:[#allocation7 + $0x1]]
    %v48 = vstv %s47
    %v49 = vmul.f32 %v46, %v48
    %v50 = vadd.f32 %v44, %v49
    %s51 = sld [smem:[#allocation2]]
    %v52 = vstv %s51
    %v53 = vadd.f32 %v50, %v52
    %v54 = vxor.u32 %v53, 2147483648
    %v55 = vmul.f32 %v54, 1.442695
    %v56 = vpow.pop %v55
    %v57 = vadd.f32 %v56, 1.0
    %v58 = vrcp.pop %v57
    %v59 = vmul.f32 1.0, %v58
    %v60 = vlaneseq
    %vm61 = vcmp.ge.s32.totalorder %v60, 0
    %vm62 = vcmp.lt.s32.totalorder %v60, 512
    %vm63 = vmand %vm61, %vm62
    %64 = vst.msk [vmem:[#allocation8] sm:$0xf] %vm63, %v59
    // Predicated region
    $region22: #{tpu_custom_call.1} parent=1 // pred_check
      _
    $region23: #{tpu_custom_call.1} parent=1 // pred_check_branch
      %66 = sbr.rel (0) target = $region25
    $region24: #{tpu_custom_call.1} parent=1 // pred_region
      %s68 = ssub.s32 64, 64
      %69 = vsyncadd [#allocation5], %s68
      %s71 = sshll.u32 [#allocation8], 4
      %s72 = int_to_ptr.vmem [resolvable:$true] %s71
      %74 = dma.vmem_to_hbm [thread:$0]  %s72, 64, %s3, [#allocation5]
    $region25: #{tpu_custom_call.1} parent=1 // pred_fallthru
      _
    // Predicated region
    $region26: #{tpu_custom_call.1} parent=1 // pred_check
      _
    $region27: #{tpu_custom_call.1} parent=1 // pred_check_branch
      %76 = sbr.rel (0) target = $region29
    $region28: #{tpu_custom_call.1} parent=1 // pred_region
      %77 = dma.done [#allocation5], 64
    $region29: #{tpu_custom_call.1} parent=1 // pred_fallthru
      _
    %78 = vsyncpa [#allocation4], 1
    %79 = vsyncpa [#allocation5], 1
    %80 = vsyncpa [#allocation6], 1

</llo_original>
